<compile_context>
chip_gen: v5e
topology: v5e:2x2
jax: 0.10.0
libtpu: 0.0.40
codegen_flags: <defaults>
</compile_context>

<pallas_src>
import jax
import jax.numpy as jnp
from jax.experimental import pallas as pl
from jax.experimental.pallas import tpu as pltpu

K_IN = 28 * 28          # 784  (full K — no padding needed)
N_OUT = 10
N_PAD = 128             # lane-dense logits
_NEG_PAD = -1e30        # padded-logit fill: vanishes under log_softmax


def fcnet_kernel(x_ref, w_ref, b_ref, o_ref):
    # x_ref: (tb, 784) f32   w_ref: (784, 128) bf16
    # b_ref: (1, 128) f32    o_ref: (tb, 128) f32
    x_bf16 = x_ref[...].astype(jnp.bfloat16)          # cast in-kernel (VPU)
    logits = jnp.dot(x_bf16, w_ref[...],
                     preferred_element_type=jnp.float32) + b_ref[...]

    # Numerically stable log_softmax along the lane dim (f32).
    m = jnp.max(logits, axis=-1, keepdims=True)        # single XLU reduce
    shifted = logits - m
    p = jnp.exp(shifted)                                # EUP

    # Exp-sum on the MXU (idle here) instead of a second XLU cross-lane
    # reduce: every column of `sums` equals sum_k p[:, k]; take column 0.
    ones = jnp.ones((N_PAD, N_PAD), jnp.bfloat16)
    sums = jnp.dot(p.astype(jnp.bfloat16), ones,
                   preferred_element_type=jnp.float32)
    lse = jnp.log(sums[:, :1])

    o_ref[...] = shifted - lse


def fcnet_forward(x_nchw, w, b, *, block_b=2048, padded_output=False):
    """x_nchw: (B, 1, 28, 28) f32; w: (10, 784) torch layout; b: (10,)."""
    B = x_nchw.shape[0]

    # Flatten exactly like torch.flatten(x, 1); keep f32 — no cast/pad pass.
    x_flat = x_nchw.reshape(B, K_IN)

    # Weight (10,784) -> (784,128) bf16, zero-padded columns (resident).
    w_t = jnp.pad(w.T.astype(jnp.bfloat16), ((0, 0), (0, N_PAD - N_OUT)))
    # Bias padded with -1e30 so padded logit columns vanish under max / exp.
    b_p = jnp.full((1, N_PAD), _NEG_PAD, jnp.float32)
    b_p = b_p.at[0, :N_OUT].set(b.astype(jnp.float32))

    # Batch tile: cap at block_b (f32 x tiles: 2048*784*4 ≈ 6.1 MiB, ~15 MiB
    # total double-buffered VMEM — fits every chip's scoped default).  For
    # B < 2*block_b split into >= 2 grid steps so the "parallel" axis shards
    # across both v7x TensorCores.
    if B >= 2 * block_b:
        tb = block_b
    else:
        half = (B + 1) // 2
        tb = max(8, ((half + 7) // 8) * 8)
    b_padded = ((B + tb - 1) // tb) * tb
    if b_padded != B:
        x_flat = jnp.pad(x_flat, ((0, b_padded - B), (0, 0)))

    grid = (b_padded // tb,)

    cost = pl.CostEstimate(
        flops=2 * b_padded * N_PAD * (K_IN + N_PAD),
        transcendentals=b_padded * (N_PAD + 1),
        bytes_accessed=(x_flat.size * 4 + w_t.size * 2 + b_p.size * 4
                        + b_padded * N_PAD * 4),
    )

    out = pl.pallas_call(
        fcnet_kernel,
        out_shape=jax.ShapeDtypeStruct((b_padded, N_PAD), jnp.float32),
        grid_spec=pltpu.PrefetchScalarGridSpec(
            num_scalar_prefetch=0,
            grid=grid,
            in_specs=[
                pl.BlockSpec((tb, K_IN), lambda i: (i, 0)),     # x: streamed f32
                pl.BlockSpec((K_IN, N_PAD), lambda i: (0, 0)),  # W: resident
                pl.BlockSpec((1, N_PAD), lambda i: (0, 0)),     # b: resident
            ],
            out_specs=pl.BlockSpec((tb, N_PAD), lambda i: (i, 0)),
        ),
        compiler_params=pltpu.CompilerParams(
            dimension_semantics=("parallel",),
        ),
        cost_estimate=cost,
    )(x_flat, w_t, b_p)

    if padded_output:
        # (b_padded, 128): columns >= 10 are ~ -1e30 - lse, rows >= B are pad.
        return out
    return out[:B, :N_OUT]


def init_params(key):
    # Mirrors nn.Linear(784, 10) default init: U(-1/sqrt(fan_in), +1/sqrt(fan_in)).
    k_w, k_b = jax.random.split(key)
    bound = 1.0 / jnp.sqrt(K_IN)
    w = jax.random.uniform(k_w, (N_OUT, K_IN), jnp.float32, -bound, bound)
    b = jax.random.uniform(k_b, (N_OUT,), jnp.float32, -bound, bound)
    return w, b


if __name__ == "__main__":
    key = jax.random.PRNGKey(0)
    k_x, k_p = jax.random.split(key)

    B = 16
    x = jax.random.normal(k_x, (B, 1, 28, 28), jnp.float32)  # NCHW like PyTorch
    w, b = init_params(k_p)

    out = fcnet_forward(x, w, b)
    jax.block_until_ready(out)

    # Reference in plain JAX (f32 end-to-end); kernel uses bf16 matmul inputs
    # with f32 accumulation, so compare with a bf16-appropriate tolerance.
    logits_ref = x.reshape(B, -1) @ w.T + b
    ref = jax.nn.log_softmax(logits_ref, axis=1)
    assert out.shape == (B, N_OUT)
    assert jnp.all(jnp.isfinite(out)), "non-finite outputs"
    assert jnp.allclose(out, ref, atol=5e-2, rtol=5e-2), "mismatch vs reference"

    print("KERNEL_OK")
</pallas_src>

<mosaic_0001>
module attributes {stable_mosaic.version = 11 : i64} {
  func.func @fcnet_kernel(%arg0: i32, %arg1: memref<8x784xf32, #tpu.memory_space<vmem>>, %arg2: memref<784x128xbf16, #tpu.memory_space<vmem>>, %arg3: memref<1x128xf32, #tpu.memory_space<vmem>>, %arg4: memref<8x128xf32, #tpu.memory_space<vmem>>) attributes {dimension_semantics = [#tpu.dimension_semantics<parallel>], iteration_bounds = array<i64: 2>, scalar_prefetch = 0 : i64, scratch_operands = 0 : i64, tpu.core_type = #tpu.core_type<tc>, window_params = [{transform_indices = @transform_0, window_bounds = array<i64: 8, 784>}, {pipeline_mode = #tpu.pipeline_mode<synchronous>, transform_indices = @transform_1, window_bounds = array<i64: 784, 128>}, {pipeline_mode = #tpu.pipeline_mode<synchronous>, transform_indices = @transform_2, window_bounds = array<i64: 1, 128>}, {transform_indices = @transform_3, window_bounds = array<i64: 8, 128>}]} {
    %c0 = arith.constant 0 : index
    %c0_0 = arith.constant 0 : index
    %0 = vector.load %arg1[%c0, %c0_0] : memref<8x784xf32, #tpu.memory_space<vmem>>, vector<8x784xf32>
    %1 = arith.truncf %0 : vector<8x784xf32> to vector<8x784xbf16>
    %c0_1 = arith.constant 0 : index
    %c0_2 = arith.constant 0 : index
    %2 = vector.load %arg2[%c0_1, %c0_2] : memref<784x128xbf16, #tpu.memory_space<vmem>>, vector<784x128xbf16>
    %cst = arith.constant dense<0.000000e+00> : vector<8x128xf32>
    %3 = tpu.matmul %1, %2, %cst {dimension_numbers = #tpu.dot_dimension_numbers<[1], [0], [0], [1], [0, 0, 1, 1], [], []>} : vector<8x784xbf16>, vector<784x128xbf16>, vector<8x128xf32> -> vector<8x128xf32>
    %c0_3 = arith.constant 0 : index
    %c0_4 = arith.constant 0 : index
    %4 = vector.load %arg3[%c0_3, %c0_4] : memref<1x128xf32, #tpu.memory_space<vmem>>, vector<1x128xf32>
    %5 = vector.broadcast %4 : vector<1x128xf32> to vector<8x128xf32>
    %6 = arith.addf %3, %5 : vector<8x128xf32>
    %cst_5 = arith.constant dense<0xFF800000> : vector<8xf32>
    %7 = vector.multi_reduction <maximumf>, %6, %cst_5 [1] : vector<8x128xf32> to vector<8xf32>
    %8 = vector.shape_cast %7 : vector<8xf32> to vector<8x1xf32>
    %9 = vector.broadcast %8 : vector<8x1xf32> to vector<8x128xf32>
    %10 = arith.subf %6, %9 : vector<8x128xf32>
    %11 = math.exp %10 : vector<8x128xf32>
    %cst_6 = arith.constant 1.000000e+00 : bf16
    %12 = vector.broadcast %cst_6 : bf16 to vector<128x128xbf16>
    %13 = arith.truncf %11 : vector<8x128xf32> to vector<8x128xbf16>
    %cst_7 = arith.constant dense<0.000000e+00> : vector<8x128xf32>
    %14 = tpu.matmul %13, %12, %cst_7 {dimension_numbers = #tpu.dot_dimension_numbers<[1], [0], [0], [1], [0, 0, 1, 1], [], []>} : vector<8x128xbf16>, vector<128x128xbf16>, vector<8x128xf32> -> vector<8x128xf32>
    %15 = vector.extract_strided_slice %14 {offsets = [0, 0], sizes = [8, 1], strides = [1, 1]} : vector<8x128xf32> to vector<8x1xf32>
    %16 = math.log %15 : vector<8x1xf32>
    %17 = vector.broadcast %16 : vector<8x1xf32> to vector<8x128xf32>
    %18 = arith.subf %10, %17 : vector<8x128xf32>
    %c0_8 = arith.constant 0 : index
    %c0_9 = arith.constant 0 : index
    %19 = vector.load %arg4[%c0_8, %c0_9] : memref<8x128xf32, #tpu.memory_space<vmem>>, vector<8x128xf32>
    tpu.vector_store %arg4[%c0_8, %c0_9], %18 {strides = array<i32>} : memref<8x128xf32, #tpu.memory_space<vmem>>, vector<8x128xf32>,
    return
  }
  func.func @transform_0(%arg0: i32) -> (i32, i32) {
    %c0_i32 = arith.constant 0 : i32
    %c0_i32_0 = arith.constant 0 : i32
    return %arg0, %c0_i32 : i32, i32
  }
  func.func @transform_1(%arg0: i32) -> (i32, i32) {
    %c0_i32 = arith.constant 0 : i32
    %c0_i32_0 = arith.constant 0 : i32
    %c0_i32_1 = arith.constant 0 : i32
    return %c0_i32, %c0_i32_0 : i32, i32
  }
  func.func @transform_2(%arg0: i32) -> (i32, i32) {
    %c0_i32 = arith.constant 0 : i32
    %c0_i32_0 = arith.constant 0 : i32
    %c0_i32_1 = arith.constant 0 : i32
    return %c0_i32, %c0_i32_0 : i32, i32
  }
  func.func @transform_3(%arg0: i32) -> (i32, i32) {
    %c0_i32 = arith.constant 0 : i32
    %c0_i32_0 = arith.constant 0 : i32
    return %arg0, %c0_i32 : i32, i32
  }
}

</mosaic_0001>

<llo_original>
// kernel: tpu_custom_call.1
$region0: #{tpu_custom_call.1}
  #allocation0 [shape = 'u32[]', space=smem, size = 0x4, offset = 0x4, fixed_abs, tag = 'smem constant byte address 0x4 - core index']
  #allocation1 [shape = 'u32[72,128]{1,0:T(1,128)}', space=vmem, size = 0x9000, scoped, tag = 'internal scratch']
  %s0 = inlined_call_operand.hbm [shape: f32[16,784], index: 0, kind: input, shape index: {}]
  %s1 = inlined_call_operand.hbm [shape: bf16[784,128], index: 1, kind: input, shape index: {}]
  %s2 = inlined_call_operand.vmem [shape: f32[1,128], index: 2, kind: input, shape index: {}]
  %s3 = inlined_call_operand.hbm [shape: f32[16,128], index: 3, kind: output, shape index: {}]
  %s4 = sld [smem:[#allocation0]]
  $region53: #{tpu_custom_call.1} parent=0
    _
  %s6 = ssub.s32 1, %s4
  %s7 = scalar_select 0, %s6, %s4
  $region1: #{tpu_custom_call.1} parent=0
    #allocation2 [shape = 'u8[57344]{0}', space=vmem, size = 0xe000, scoped, tag = 'input window, operand 0']
    #allocation3 [shape = 's32[2]{0}', space=sflag, size = 0x8, scoped, tag = 'scoped memory for tpu_custom_call.1']
    #allocation4 [shape = 's32[2]{0}', space=sflag, size = 0x8, scoped, tag = 'scoped memory for tpu_custom_call.1']
    #allocation5 [shape = 'u8[200704]{0}', space=vmem, size = 0x31000, scoped, tag = 'input window, operand 1, single buffered']
    #allocation6 [shape = 's32[1]{0}', space=sflag, size = 0x4, scoped, tag = 'scoped memory for tpu_custom_call.1']
    #allocation7 [shape = 'u8[8192]{0}', space=vmem, size = 0x2000, scoped, tag = 'output window, operand 0']
    %8 = vsyncpa [#allocation3], 0
    %s9 = scalar_lea.sflag [#allocation3], 1
    %10 = vsyncpa %s9, 0
    %11 = vsyncpa [#allocation6], 0
    %12 = vsyncpa [#allocation4], 0
    %s13 = scalar_lea.sflag [#allocation4], 1
    %14 = vsyncpa %s13, 0
    loop: start=0, step=1, limit=4
    $region2: #{tpu_custom_call.1} parent=1 // loop_pre_header
      _
    $region3: #{tpu_custom_call.1} parent=1 // loop_header
      %s16 = sphi 0, %s20
      %p17 = scmp.ge.s32.totalorder %s16, 4
      %s26 = sphi 0, %s28
      %s29 = sphi 0, %s26
      %s30 = sphi 0, %s29
      %s46 = sphi 0, %s30
      %s50 = sphi 0, %s50
      %s52 = sphi 0, %s50
      %s53 = sphi 0, %s52
      %s67 = sphi 0, %s53
      %s71 = sphi 0, %s71
      %s73 = sphi 0, %s71
      %s74 = sphi 0, %s73
      %s88 = sphi 0, %s74
      %s94 = sphi 0, %s96
      %s97 = sphi 0, %s94
      %s98 = sphi 0, %s97
      %s114 = sphi 0, %s98
    $region4: #{tpu_custom_call.1} parent=1 // loop_header_branch
      %19 = sbr.rel (%p17) target = $region8
    $region5: #{tpu_custom_call.1} parent=1 // loop_body
      %s21 = ssub.s32 %s16, 1
      %s22 = ssub.s32 %s16, 2
      %s23 = sadd.s32 %s16, 1
      %s24 = ssub.s32 %s16, %s23
      %p25 = scmp.eq.s32.totalorder %s24, 0
      %s27 = sadd.s32 %s26, 1
      %s28 = scalar_select %p25, %s26, %s27
      %p31 = pneg %p25
      %p32 = scmp.eq.s32.totalorder %s16, 1
      %p33 = por %p31, %p32
      %p34 = scmp.ne.s32.totalorder %s26, %s29
      %p35 = scmp.eq.s32.totalorder %s16, 0
      %p36 = por %p34, %p35
      %p37 = scmp.ne.s32.totalorder %s26, %s29
      %p38 = scmp.eq.s32.totalorder %s21, 1
      %p39 = por %p37, %p38
      %p40 = scmp.ne.s32.totalorder %s29, %s30
      %p41 = scmp.eq.s32.totalorder %s21, 0
      %p42 = por %p40, %p41
      %p43 = scmp.ne.s32.totalorder %s29, %s30
      %p44 = scmp.eq.s32.totalorder %s22, 1
      %p45 = por %p43, %p44
      %p47 = scmp.ne.s32.totalorder %s30, %s46
      %p48 = scmp.eq.s32.totalorder %s22, 0
      %p49 = por %p47, %p48
      %s51 = sadd.s32 %s50, 1
      %p54 = scmp.eq.s32.totalorder %s16, 1
      %p55 = scmp.ne.s32.totalorder %s50, %s52
      %p56 = scmp.eq.s32.totalorder %s16, 0
      %p57 = por %p55, %p56
      %p58 = scmp.ne.s32.totalorder %s50, %s52
      %p59 = scmp.eq.s32.totalorder %s21, 1
      %p60 = por %p58, %p59
      %p61 = scmp.ne.s32.totalorder %s52, %s53
      %p62 = scmp.eq.s32.totalorder %s21, 0
      %p63 = por %p61, %p62
      %p64 = scmp.ne.s32.totalorder %s52, %s53
      %p65 = scmp.eq.s32.totalorder %s22, 1
      %p66 = por %p64, %p65
      %p68 = scmp.ne.s32.totalorder %s53, %s67
      %p69 = scmp.eq.s32.totalorder %s22, 0
      %p70 = por %p68, %p69
      %s72 = sadd.s32 %s71, 1
      %p75 = scmp.eq.s32.totalorder %s16, 1
      %p76 = scmp.ne.s32.totalorder %s71, %s73
      %p77 = scmp.eq.s32.totalorder %s16, 0
      %p78 = por %p76, %p77
      %p79 = scmp.ne.s32.totalorder %s71, %s73
      %p80 = scmp.eq.s32.totalorder %s21, 1
      %p81 = por %p79, %p80
      %p82 = scmp.ne.s32.totalorder %s73, %s74
      %p83 = scmp.eq.s32.totalorder %s21, 0
      %p84 = por %p82, %p83
      %p85 = scmp.ne.s32.totalorder %s73, %s74
      %p86 = scmp.eq.s32.totalorder %s22, 1
      %p87 = por %p85, %p86
      %p89 = scmp.ne.s32.totalorder %s74, %s88
      %p90 = scmp.eq.s32.totalorder %s22, 0
      %p91 = por %p89, %p90
      %s92 = ssub.s32 %s16, %s23
      %p93 = scmp.eq.s32.totalorder %s92, 0
      %s95 = sadd.s32 %s94, 1
      %s96 = scalar_select %p93, %s94, %s95
      %p99 = pneg %p93
      %p100 = scmp.eq.s32.totalorder %s16, 1
      %p101 = por %p99, %p100
      %p102 = scmp.ne.s32.totalorder %s94, %s97
      %p103 = scmp.eq.s32.totalorder %s16, 0
      %p104 = por %p102, %p103
      %p105 = scmp.ne.s32.totalorder %s94, %s97
      %p106 = scmp.eq.s32.totalorder %s21, 1
      %p107 = por %p105, %p106
      %p108 = scmp.ne.s32.totalorder %s97, %s98
      %p109 = scmp.eq.s32.totalorder %s21, 0
      %p110 = por %p108, %p109
      %p111 = scmp.ne.s32.totalorder %s97, %s98
      %p112 = scmp.eq.s32.totalorder %s22, 1
      %p113 = por %p111, %p112
      %p115 = scmp.ne.s32.totalorder %s98, %s114
      %p116 = scmp.eq.s32.totalorder %s22, 0
      %p117 = por %p115, %p116
      %p118 = scmp.le.s32.totalorder 1, %s16
      %p119 = scmp.lt.s32.totalorder %s16, 3
      %p120 = pnand %p118, %p119
      %p121 = pneg %p120
      // Predicated region
      $region9: #{tpu_custom_call.1} parent=5 // pred_check
        _
      $region10: #{tpu_custom_call.1} parent=5 // pred_check_branch
        %123 = sbr.rel (%p120) target = $region12
      $region11: #{tpu_custom_call.1} parent=5 // pred_region
        %s124 = ssub.s32 %s16, 1
        // Predicated region
        $region13: #{tpu_custom_call.1} parent=11 // pred_check
          %p125 = pneg %p63
        $region14: #{tpu_custom_call.1} parent=11 // pred_check_branch
          %127 = sbr.rel (%p125) target = $region16
        $region15: #{tpu_custom_call.1} parent=11 // pred_region
          %129 = vsyncadd [#allocation6], 0
          %s130 = sshll.u32 %s1, 4
          %s131 = int_to_ptr.hbm [resolvable:$true] %s130
          %s132 = sshll.u32 [#allocation5], 4
          %s133 = int_to_ptr.vmem [resolvable:$true] %s132
          %138 = dma.hbm_to_vmem [thread:$0]  %s131, 6272, %s133, [#allocation6], 64, 64, 4
        $region16: #{tpu_custom_call.1} parent=11 // pred_fallthru
          _
        // Predicated region
        $region17: #{tpu_custom_call.1} parent=11 // pred_check
          %p139 = pneg %p84
        $region18: #{tpu_custom_call.1} parent=11 // pred_check_branch
          %141 = sbr.rel (%p139) target = $region20
        $region19: #{tpu_custom_call.1} parent=11 // pred_region
          _
        $region20: #{tpu_custom_call.1} parent=11 // pred_fallthru
          _
      $region12: #{tpu_custom_call.1} parent=5 // pred_fallthru
        _
      %p142 = scmp.lt.s32.totalorder %s16, 2
      // Predicated region
      $region21: #{tpu_custom_call.1} parent=5 // pred_check
        %p143 = pneg %p142
      $region22: #{tpu_custom_call.1} parent=5 // pred_check_branch
        %145 = sbr.rel (%p143) target = $region24
      $region23: #{tpu_custom_call.1} parent=5 // pred_region
        // Predicated region
        $region25: #{tpu_custom_call.1} parent=23 // pred_check
          %p146 = pneg %p36
        $region26: #{tpu_custom_call.1} parent=23 // pred_check_branch
          %148 = sbr.rel (%p146) target = $region28
        $region27: #{tpu_custom_call.1} parent=23 // pred_region
          %s149 = sand.u32 %s26, 1
          %s150 = scalar_lea.sflag [#allocation3], %s149
          %s151 = sand.u32 %s26, 1
          %s152 = smul.addr %s151, 56
          %s153 = scalar_lea.vmem [#allocation2], %s152
          %155 = vsyncadd %s150, 0
          %s156 = smul.addr %s16, 7
          %s157 = smul.addr %s156, 8
          %s158 = scalar_lea.hbm %s0, %s157
          %s160 = sshll.u32 %s158, 4
          %s161 = int_to_ptr.hbm [resolvable:$true] %s160
          %s162 = sshll.u32 %s153, 4
          %s163 = int_to_ptr.vmem [resolvable:$true] %s162
          %165 = dma.hbm_to_vmem [thread:$0]  %s161, 896, %s163, %s150
        $region28: #{tpu_custom_call.1} parent=23 // pred_fallthru
          _
      $region24: #{tpu_custom_call.1} parent=5 // pred_fallthru
        _
      %p166 = scmp.le.s32.totalorder 1, %s16
      %p167 = scmp.lt.s32.totalorder %s16, 3
      %p168 = pnand %p166, %p167
      %p169 = pneg %p168
      // Predicated region
      $region29: #{tpu_custom_call.1} parent=5 // pred_check
        _
      $region30: #{tpu_custom_call.1} parent=5 // pred_check_branch
        %171 = sbr.rel (%p168) target = $region32
      $region31: #{tpu_custom_call.1} parent=5 // pred_region
        %s172 = ssub.s32 %s16, 1
        %s173 = sand.u32 %s29, 1
        %s174 = scalar_lea.sflag [#allocation3], %s173
        %s175 = sand.u32 %s29, 1
        %s176 = smul.addr %s175, 56
        %s177 = scalar_lea.vmem [#allocation2], %s176
        // Predicated region
        $region33: #{tpu_custom_call.1} parent=31 // pred_check
          %p178 = pneg %p42
        $region34: #{tpu_custom_call.1} parent=31 // pred_check_branch
          %180 = sbr.rel (%p178) target = $region36
        $region35: #{tpu_custom_call.1} parent=31 // pred_region
          %182 = dma.done %s174, 896
        $region36: #{tpu_custom_call.1} parent=31 // pred_fallthru
          _
        // Predicated region
        $region37: #{tpu_custom_call.1} parent=31 // pred_check
          %p183 = pneg %p63
        $region38: #{tpu_custom_call.1} parent=31 // pred_check_branch
          %185 = sbr.rel (%p183) target = $region40
        $region39: #{tpu_custom_call.1} parent=31 // pred_region
          %187 = dma.done [#allocation6], 6272
        $region40: #{tpu_custom_call.1} parent=31 // pred_fallthru
          _
        %s188 = sand.u32 %s29, 1
        %s189 = scalar_lea.sflag [#allocation3], %s188
        %s190 = sand.u32 %s29, 1
        %s191 = smul.addr %s190, 56
        %s192 = scalar_lea.vmem [#allocation2], %s191
        %p193 = pneg %p42
        %p194 = pneg %p39
        %p195 = pneg %p63
        %p196 = pneg %p60
        %p197 = pneg %p84
        %p198 = pneg %p81
        %p199 = pneg %p110
        %p200 = pneg %p107
        %s201 = sand.u32 %s97, 1
        %s202 = scalar_lea.sflag [#allocation4], %s201
        %s203 = sand.u32 %s97, 1
        %s204 = smul.addr %s203, 8
        %s205 = scalar_lea.vmem [#allocation7], %s204
        %v208 = vld [vmem:[%s177] sm:$0xff]
        %v209 = vld [vmem:[%s177 + $0x8] sm:$0xff]
        %v210 = vld [vmem:[%s177 + $0x10] sm:$0xff]
        %v211 = vld [vmem:[%s177 + $0x18] sm:$0xff]
        %v212 = vld [vmem:[%s177 + $0x20] sm:$0xff]
        %v213 = vld [vmem:[%s177 + $0x28] sm:$0xff]
        %v214 = vld [vmem:[%s177 + $0x30] sm:$0xff]
        %v215 = vpack.c.bf16 %v208, %v208
        %v216 = vpack.c.bf16 %v209, %v209
        %v217 = vpack.c.bf16 %v210, %v210
        %v218 = vpack.c.bf16 %v211, %v211
        %v219 = vpack.c.bf16 %v212, %v212
        %v220 = vpack.c.bf16 %v213, %v213
        %v221 = vpack.c.bf16 %v214, %v214
        %v222 = vld [vmem:[#allocation5] sm:$0xf]
        %v223 = vld [vmem:[#allocation5 + $0x4] sm:$0xf]
        %v224 = vld [vmem:[#allocation5 + $0x8] sm:$0xf]
        %v225 = vld [vmem:[#allocation5 + $0xc] sm:$0xf]
        %v226 = vld [vmem:[#allocation5 + $0x10] sm:$0xf]
        %v227 = vld [vmem:[#allocation5 + $0x14] sm:$0xf]
        %v228 = vld [vmem:[#allocation5 + $0x18] sm:$0xf]
        %v229 = vld [vmem:[#allocation5 + $0x1c] sm:$0xf]
        %v230 = vld [vmem:[#allocation5 + $0x20] sm:$0xf]
        %v231 = vld [vmem:[#allocation5 + $0x24] sm:$0xf]
        %v232 = vld [vmem:[#allocation5 + $0x28] sm:$0xf]
        %v233 = vld [vmem:[#allocation5 + $0x2c] sm:$0xf]
        %v234 = vld [vmem:[#allocation5 + $0x30] sm:$0xf]
        %v235 = vld [vmem:[#allocation5 + $0x34] sm:$0xf]
        %v236 = vld [vmem:[#allocation5 + $0x38] sm:$0xf]
        %v237 = vld [vmem:[#allocation5 + $0x3c] sm:$0xf]
        %v238 = vld [vmem:[#allocation5 + $0x40] sm:$0xf]
        %v239 = vld [vmem:[#allocation5 + $0x44] sm:$0xf]
        %v240 = vld [vmem:[#allocation5 + $0x48] sm:$0xf]
        %v241 = vld [vmem:[#allocation5 + $0x4c] sm:$0xf]
        %v242 = vld [vmem:[#allocation5 + $0x50] sm:$0xf]
        %v243 = vld [vmem:[#allocation5 + $0x54] sm:$0xf]
        %v244 = vld [vmem:[#allocation5 + $0x58] sm:$0xf]
        %v245 = vld [vmem:[#allocation5 + $0x5c] sm:$0xf]
        %v246 = vld [vmem:[#allocation5 + $0x60] sm:$0xf]
        %v247 = vld [vmem:[#allocation5 + $0x64] sm:$0xf]
        %v248 = vld [vmem:[#allocation5 + $0x68] sm:$0xf]
        %v249 = vld [vmem:[#allocation5 + $0x6c] sm:$0xf]
        %v250 = vld [vmem:[#allocation5 + $0x70] sm:$0xf]
        %v251 = vld [vmem:[#allocation5 + $0x74] sm:$0xf]
        %v252 = vld [vmem:[#allocation5 + $0x78] sm:$0xf]
        %v253 = vld [vmem:[#allocation5 + $0x7c] sm:$0xf]
        %v254 = vld [vmem:[#allocation5 + $0x80] sm:$0xf]
        %v255 = vld [vmem:[#allocation5 + $0x84] sm:$0xf]
        %v256 = vld [vmem:[#allocation5 + $0x88] sm:$0xf]
        %v257 = vld [vmem:[#allocation5 + $0x8c] sm:$0xf]
        %v258 = vld [vmem:[#allocation5 + $0x90] sm:$0xf]
        %v259 = vld [vmem:[#allocation5 + $0x94] sm:$0xf]
        %v260 = vld [vmem:[#allocation5 + $0x98] sm:$0xf]
        %v261 = vld [vmem:[#allocation5 + $0x9c] sm:$0xf]
        %v262 = vld [vmem:[#allocation5 + $0xa0] sm:$0xf]
        %v263 = vld [vmem:[#allocation5 + $0xa4] sm:$0xf]
        %v264 = vld [vmem:[#allocation5 + $0xa8] sm:$0xf]
        %v265 = vld [vmem:[#allocation5 + $0xac] sm:$0xf]
        %v266 = vld [vmem:[#allocation5 + $0xb0] sm:$0xf]
        %v267 = vld [vmem:[#allocation5 + $0xb4] sm:$0xf]
        %v268 = vld [vmem:[#allocation5 + $0xb8] sm:$0xf]
        %v269 = vld [vmem:[#allocation5 + $0xbc] sm:$0xf]
        %v270 = vld [vmem:[#allocation5 + $0xc0] sm:$0xf]
        %v271 = vld [vmem:[#allocation5 + $0xc4] sm:$0xf]
        %v272 = vld [vmem:[#allocation5 + $0xc8] sm:$0xf]
        %v273 = vld [vmem:[#allocation5 + $0xcc] sm:$0xf]
        %v274 = vld [vmem:[#allocation5 + $0xd0] sm:$0xf]
        %v275 = vld [vmem:[#allocation5 + $0xd4] sm:$0xf]
        %v276 = vld [vmem:[#allocation5 + $0xd8] sm:$0xf]
        %v277 = vld [vmem:[#allocation5 + $0xdc] sm:$0xf]
        %v278 = vld [vmem:[#allocation5 + $0xe0] sm:$0xf]
        %v279 = vld [vmem:[#allocation5 + $0xe4] sm:$0xf]
        %v280 = vld [vmem:[#allocation5 + $0xe8] sm:$0xf]
        %v281 = vld [vmem:[#allocation5 + $0xec] sm:$0xf]
        %v282 = vld [vmem:[#allocation5 + $0xf0] sm:$0xf]
        %v283 = vld [vmem:[#allocation5 + $0xf4] sm:$0xf]
        %v284 = vld [vmem:[#allocation5 + $0xf8] sm:$0xf]
        %v285 = vld [vmem:[#allocation5 + $0xfc] sm:$0xf]
        %v286 = vld [vmem:[#allocation5 + $0x100] sm:$0xf]
        %v287 = vld [vmem:[#allocation5 + $0x104] sm:$0xf]
        %v288 = vld [vmem:[#allocation5 + $0x108] sm:$0xf]
        %v289 = vld [vmem:[#allocation5 + $0x10c] sm:$0xf]
        %v290 = vld [vmem:[#allocation5 + $0x110] sm:$0xf]
        %v291 = vld [vmem:[#allocation5 + $0x114] sm:$0xf]
        %v292 = vld [vmem:[#allocation5 + $0x118] sm:$0xf]
        %v293 = vld [vmem:[#allocation5 + $0x11c] sm:$0xf]
        %v294 = vld [vmem:[#allocation5 + $0x120] sm:$0xf]
        %v295 = vld [vmem:[#allocation5 + $0x124] sm:$0xf]
        %v296 = vld [vmem:[#allocation5 + $0x128] sm:$0xf]
        %v297 = vld [vmem:[#allocation5 + $0x12c] sm:$0xf]
        %v298 = vld [vmem:[#allocation5 + $0x130] sm:$0xf]
        %v299 = vld [vmem:[#allocation5 + $0x134] sm:$0xf]
        %v300 = vld [vmem:[#allocation5 + $0x138] sm:$0xf]
        %v301 = vld [vmem:[#allocation5 + $0x13c] sm:$0xf]
        %v302 = vld [vmem:[#allocation5 + $0x140] sm:$0xf]
        %v303 = vld [vmem:[#allocation5 + $0x144] sm:$0xf]
        %v304 = vld [vmem:[#allocation5 + $0x148] sm:$0xf]
        %v305 = vld [vmem:[#allocation5 + $0x14c] sm:$0xf]
        %v306 = vld [vmem:[#allocation5 + $0x150] sm:$0xf]
        %v307 = vld [vmem:[#allocation5 + $0x154] sm:$0xf]
        %v308 = vld [vmem:[#allocation5 + $0x158] sm:$0xf]
        %v309 = vld [vmem:[#allocation5 + $0x15c] sm:$0xf]
        %v310 = vld [vmem:[#allocation5 + $0x160] sm:$0xf]
        %v311 = vld [vmem:[#allocation5 + $0x164] sm:$0xf]
        %v312 = vld [vmem:[#allocation5 + $0x168] sm:$0xf]
        %v313 = vld [vmem:[#allocation5 + $0x16c] sm:$0xf]
        %v314 = vld [vmem:[#allocation5 + $0x170] sm:$0xf]
        %v315 = vld [vmem:[#allocation5 + $0x174] sm:$0xf]
        %v316 = vld [vmem:[#allocation5 + $0x178] sm:$0xf]
        %v317 = vld [vmem:[#allocation5 + $0x17c] sm:$0xf]
        %v318 = vld [vmem:[#allocation5 + $0x180] sm:$0xf]
        %v319 = vld [vmem:[#allocation5 + $0x184] sm:$0xf]
        %v320 = vld [vmem:[%s2] sm:$0x1]
        %v322 = vperm.slane %v320, 0
        %v422 = vunpack.c.l.b16 %v222
        %v423 = vunpack.c.l.b16 %v223
        %v424 = vunpack.c.l.b16 %v224
        %v425 = vunpack.c.l.b16 %v225
        %v426 = vunpack.c.l.b16 %v226
        %v427 = vunpack.c.l.b16 %v227
        %v428 = vunpack.c.l.b16 %v228
        %v429 = vunpack.c.l.b16 %v229
        %v430 = vunpack.c.l.b16 %v230
        %v431 = vunpack.c.l.b16 %v231
        %v432 = vunpack.c.l.b16 %v232
        %v433 = vunpack.c.l.b16 %v233
        %v434 = vunpack.c.l.b16 %v234
        %v435 = vunpack.c.l.b16 %v235
        %v436 = vunpack.c.l.b16 %v236
        %v437 = vunpack.c.l.b16 %v237
        %v438 = vunpack.c.l.b16 %v238
        %v439 = vunpack.c.l.b16 %v239
        %v440 = vunpack.c.l.b16 %v240
        %v441 = vunpack.c.l.b16 %v241
        %v442 = vunpack.c.l.b16 %v242
        %v443 = vunpack.c.l.b16 %v243
        %v444 = vunpack.c.l.b16 %v244
        %v445 = vunpack.c.l.b16 %v245
        %v446 = vunpack.c.l.b16 %v246
        %v447 = vunpack.c.l.b16 %v247
        %v448 = vunpack.c.l.b16 %v248
        %v449 = vunpack.c.l.b16 %v249
        %v450 = vunpack.c.l.b16 %v250
        %v451 = vunpack.c.l.b16 %v251
        %v452 = vunpack.c.l.b16 %v252
        %v453 = vunpack.c.l.b16 %v253
        %v454 = vunpack.c.l.b16 %v254
        %v455 = vunpack.c.l.b16 %v255
        %v456 = vunpack.c.l.b16 %v256
        %v457 = vunpack.c.l.b16 %v257
        %v458 = vunpack.c.l.b16 %v258
        %v459 = vunpack.c.l.b16 %v259
        %v460 = vunpack.c.l.b16 %v260
        %v461 = vunpack.c.l.b16 %v261
        %v462 = vunpack.c.l.b16 %v262
        %v463 = vunpack.c.l.b16 %v263
        %v464 = vunpack.c.l.b16 %v264
        %v465 = vunpack.c.l.b16 %v265
        %v466 = vunpack.c.l.b16 %v266
        %v467 = vunpack.c.l.b16 %v267
        %v468 = vunpack.c.l.b16 %v268
        %v469 = vunpack.c.l.b16 %v269
        %v470 = vunpack.c.l.b16 %v270
        %v471 = vunpack.c.l.b16 %v271
        %v472 = vunpack.c.l.b16 %v272
        %v473 = vunpack.c.l.b16 %v273
        %v474 = vunpack.c.l.b16 %v274
        %v475 = vunpack.c.l.b16 %v275
        %v476 = vunpack.c.l.b16 %v276
        %v477 = vunpack.c.l.b16 %v277
        %v478 = vunpack.c.l.b16 %v278
        %v479 = vunpack.c.l.b16 %v279
        %v480 = vunpack.c.l.b16 %v280
        %v481 = vunpack.c.l.b16 %v281
        %v482 = vunpack.c.l.b16 %v282
        %v483 = vunpack.c.l.b16 %v283
        %v484 = vunpack.c.l.b16 %v284
        %v485 = vunpack.c.l.b16 %v285
        %v486 = vunpack.c.l.b16 %v286
        %v487 = vunpack.c.l.b16 %v287
        %v488 = vunpack.c.l.b16 %v288
        %v489 = vunpack.c.l.b16 %v289
        %v490 = vunpack.c.l.b16 %v290
        %v491 = vunpack.c.l.b16 %v291
        %v492 = vunpack.c.l.b16 %v292
        %v493 = vunpack.c.l.b16 %v293
        %v494 = vunpack.c.l.b16 %v294
        %v495 = vunpack.c.l.b16 %v295
        %v496 = vunpack.c.l.b16 %v296
        %v497 = vunpack.c.l.b16 %v297
        %v498 = vunpack.c.l.b16 %v298
        %v499 = vunpack.c.l.b16 %v299
        %v500 = vunpack.c.l.b16 %v300
        %v501 = vunpack.c.l.b16 %v301
        %v502 = vunpack.c.l.b16 %v302
        %v503 = vunpack.c.l.b16 %v303
        %v504 = vunpack.c.l.b16 %v304
        %v505 = vunpack.c.l.b16 %v305
        %v506 = vunpack.c.l.b16 %v306
        %v507 = vunpack.c.l.b16 %v307
        %v508 = vunpack.c.l.b16 %v308
        %v509 = vunpack.c.l.b16 %v309
        %v510 = vunpack.c.l.b16 %v310
        %v511 = vunpack.c.l.b16 %v311
        %v512 = vunpack.c.l.b16 %v312
        %v513 = vunpack.c.l.b16 %v313
        %v514 = vunpack.c.l.b16 %v314
        %v515 = vunpack.c.l.b16 %v315
        %v516 = vunpack.c.l.b16 %v316
        %v517 = vunpack.c.l.b16 %v317
        %v518 = vunpack.c.l.b16 %v318
        %v519 = vunpack.c.l.b16 %v319
        %v520 = vpack.c.b16 %v423, %v422
        %v521 = vpack.c.b16 %v425, %v424
        %v522 = vpack.c.b16 %v427, %v426
        %v523 = vpack.c.b16 %v429, %v428
        %v524 = vpack.c.b16 %v431, %v430
        %v525 = vpack.c.b16 %v433, %v432
        %v526 = vpack.c.b16 %v435, %v434
        %v527 = vpack.c.b16 %v437, %v436
        %v528 = vpack.c.b16 %v439, %v438
        %v529 = vpack.c.b16 %v441, %v440
        %v530 = vpack.c.b16 %v443, %v442
        %v531 = vpack.c.b16 %v445, %v444
        %v532 = vpack.c.b16 %v447, %v446
        %v533 = vpack.c.b16 %v449, %v448
        %v534 = vpack.c.b16 %v451, %v450
        %v535 = vpack.c.b16 %v453, %v452
        %v536 = vpack.c.b16 %v455, %v454
        %v537 = vpack.c.b16 %v457, %v456
        %v538 = vpack.c.b16 %v459, %v458
        %v539 = vpack.c.b16 %v461, %v460
        %v540 = vpack.c.b16 %v463, %v462
        %v541 = vpack.c.b16 %v465, %v464
        %v542 = vpack.c.b16 %v467, %v466
        %v543 = vpack.c.b16 %v469, %v468
        %v544 = vpack.c.b16 %v471, %v470
        %v545 = vpack.c.b16 %v473, %v472
        %v546 = vpack.c.b16 %v475, %v474
        %v547 = vpack.c.b16 %v477, %v476
        %v548 = vpack.c.b16 %v479, %v478
        %v549 = vpack.c.b16 %v481, %v480
        %v550 = vpack.c.b16 %v483, %v482
        %v551 = vpack.c.b16 %v485, %v484
        %v552 = vpack.c.b16 %v487, %v486
        %v553 = vpack.c.b16 %v489, %v488
        %v554 = vpack.c.b16 %v491, %v490
        %v555 = vpack.c.b16 %v493, %v492
        %v556 = vpack.c.b16 %v495, %v494
        %v557 = vpack.c.b16 %v497, %v496
        %v558 = vpack.c.b16 %v499, %v498
        %v559 = vpack.c.b16 %v501, %v500
        %v560 = vpack.c.b16 %v503, %v502
        %v561 = vpack.c.b16 %v505, %v504
        %v562 = vpack.c.b16 %v507, %v506
        %v563 = vpack.c.b16 %v509, %v508
        %v564 = vpack.c.b16 %v511, %v510
        %v565 = vpack.c.b16 %v513, %v512
        %v566 = vpack.c.b16 %v515, %v514
        %v567 = vpack.c.b16 %v517, %v516
        %v568 = vpack.c.b16 %v519, %v518
        %vm618 = vcmask 130048
        %v620 = vsel %vm618, %v221, 0
        %622 = vmatpush.bf16.msra.mxu0 %v527
        %623 = vmatpush.bf16.msra.mxu0 %v526
        %624 = vmatpush.bf16.msra.mxu0 %v525
        %625 = vmatpush.bf16.msra.mxu0 %v524
        %626 = vmatpush.bf16.msra.mxu0 %v523
        %627 = vmatpush.bf16.msra.mxu0 %v522
        %628 = vmatpush.bf16.msra.mxu0 %v521
        %629 = vmatpush.bf16.msra.mxu0 %v520
        %630 = vmatmul.bf16.gmra.mxu0 %v215
        %v631 = vpop.f32.mrf.mxu0
        %v632 = vadd.f32 %v322, %v631
        %v633 = vpop.f32.mrf.mxu0
        %634 = vdwg.mxu0
        %635 = vmatpush.bf16.msra.mxu0 %v535
        %636 = vmatpush.bf16.msra.mxu0 %v534
        %637 = vmatpush.bf16.msra.mxu0 %v533
        %638 = vmatpush.bf16.msra.mxu0 %v532
        %639 = vmatpush.bf16.msra.mxu0 %v531
        %640 = vmatpush.bf16.msra.mxu0 %v530
        %641 = vmatpush.bf16.msra.mxu0 %v529
        %642 = vmatpush.bf16.msra.mxu0 %v528
        %643 = vmatmul.bf16.gmra.mxu0 %v216
        %v644 = vpop.f32.mrf.mxu0
        %v645 = vadd.f32 %v632, %v644
        %v646 = vpop.f32.mrf.mxu0
        %647 = vdwg.mxu0
        %648 = vmatpush.bf16.msra.mxu0 %v543
        %649 = vmatpush.bf16.msra.mxu0 %v542
        %650 = vmatpush.bf16.msra.mxu0 %v541
        %651 = vmatpush.bf16.msra.mxu0 %v540
        %652 = vmatpush.bf16.msra.mxu0 %v539
        %653 = vmatpush.bf16.msra.mxu0 %v538
        %654 = vmatpush.bf16.msra.mxu0 %v537
        %655 = vmatpush.bf16.msra.mxu0 %v536
        %656 = vmatmul.bf16.gmra.mxu0 %v217
        %v657 = vpop.f32.mrf.mxu0
        %v658 = vadd.f32 %v645, %v657
        %v659 = vpop.f32.mrf.mxu0
        %660 = vdwg.mxu0
        %661 = vmatpush.bf16.msra.mxu0 %v551
        %662 = vmatpush.bf16.msra.mxu0 %v550
        %663 = vmatpush.bf16.msra.mxu0 %v549
        %664 = vmatpush.bf16.msra.mxu0 %v548
        %665 = vmatpush.bf16.msra.mxu0 %v547
        %666 = vmatpush.bf16.msra.mxu0 %v546
        %667 = vmatpush.bf16.msra.mxu0 %v545
        %668 = vmatpush.bf16.msra.mxu0 %v544
        %669 = vmatmul.bf16.gmra.mxu0 %v218
        %v670 = vpop.f32.mrf.mxu0
        %v671 = vadd.f32 %v658, %v670
        %v672 = vpop.f32.mrf.mxu0
        %673 = vdwg.mxu0
        %674 = vmatpush.bf16.msra.mxu0 %v559
        %675 = vmatpush.bf16.msra.mxu0 %v558
        %676 = vmatpush.bf16.msra.mxu0 %v557
        %677 = vmatpush.bf16.msra.mxu0 %v556
        %678 = vmatpush.bf16.msra.mxu0 %v555
        %679 = vmatpush.bf16.msra.mxu0 %v554
        %680 = vmatpush.bf16.msra.mxu0 %v553
        %681 = vmatpush.bf16.msra.mxu0 %v552
        %682 = vmatmul.bf16.gmra.mxu0 %v219
        %v683 = vpop.f32.mrf.mxu0
        %v684 = vadd.f32 %v671, %v683
        %v685 = vpop.f32.mrf.mxu0
        %686 = vdwg.mxu0
        %687 = vmatpush.bf16.msra.mxu0 %v567
        %688 = vmatpush.bf16.msra.mxu0 %v566
        %689 = vmatpush.bf16.msra.mxu0 %v565
        %690 = vmatpush.bf16.msra.mxu0 %v564
        %691 = vmatpush.bf16.msra.mxu0 %v563
        %692 = vmatpush.bf16.msra.mxu0 %v562
        %693 = vmatpush.bf16.msra.mxu0 %v561
        %694 = vmatpush.bf16.msra.mxu0 %v560
        %695 = vmatmul.bf16.gmra.mxu0 %v220
        %v696 = vpop.f32.mrf.mxu0
        %v697 = vadd.f32 %v684, %v696
        %v698 = vpop.f32.mrf.mxu0
        %699 = vdwg.mxu0
        %700 = vmatpush.bf16.msra.mxu0 0
        %701 = vmatpush.bf16.msra.mxu0 0
        %702 = vmatpush.bf16.msra.mxu0 0
        %703 = vmatpush.bf16.msra.mxu0 0
        %704 = vmatpush.bf16.msra.mxu0 0
        %705 = vmatpush.bf16.msra.mxu0 0
        %706 = vmatpush.bf16.msra.mxu0 0
        %707 = vmatpush.bf16.msra.mxu0 %v568
        %708 = vmatmul.bf16.gmra.mxu0 %v620
        %v709 = vpop.f32.mrf.mxu0
        %v710 = vadd.f32 %v697, %v709
        %v711 = vpop.f32.mrf.mxu0
        %712 = vdwg.mxu0
        %713 = vmax.xlane.f32.xlu0 %v710
        %v714 = vpop.xlane.xlu0 %713
        %v715 = vsub.f32 %v710, %v714
        %v716 = vmul.f32 %v715, 1.442695
        %v717 = vpow.pop %v716
        %v718 = vpack.c.bf16 %v717, %v717
        %719 = vmatpush.bf16.msra.mxu0 1065369472
        %720 = vmatpush.bf16.msra.mxu0 1065369472
        %721 = vmatpush.bf16.msra.mxu0 1065369472
        %722 = vmatpush.bf16.msra.mxu0 1065369472
        %723 = vmatpush.bf16.msra.mxu0 1065369472
        %724 = vmatpush.bf16.msra.mxu0 1065369472
        %725 = vmatpush.bf16.msra.mxu0 1065369472
        %726 = vmatpush.bf16.msra.mxu0 1065369472
        %727 = vmatmul.bf16.gmra.mxu0 %v718
        %v728 = vpop.f32.mrf.mxu0
        %v729 = vadd.f32 0.0, %v728
        %v730 = vpop.f32.mrf.mxu0
        %731 = vdwg.mxu0
        %v732 = vlog2.pop %v729
        %v733 = vmul.f32 %v732, 0.6931472
        %735 = vset.pattern.permute.xlu0 0
        %736 = vperm.xlu0 %735, %v733
        %v737 = vpop.permute.xlu0 %736
        %v739 = vsub.f32 %v715, %v737
        %740 = vst [vmem:[%s205] sm:$0xff] %v739
        %s741 = sand.u32 %s97, 1
        %s742 = scalar_lea.sflag [#allocation4], %s741
        %s743 = sand.u32 %s97, 1
        %s744 = smul.addr %s743, 8
        %s745 = scalar_lea.vmem [#allocation7], %s744
        // Predicated region
        $region41: #{tpu_custom_call.1} parent=31 // pred_check
          %p746 = pneg %p107
        $region42: #{tpu_custom_call.1} parent=31 // pred_check_branch
          %748 = sbr.rel (%p746) target = $region44
        $region43: #{tpu_custom_call.1} parent=31 // pred_region
          %750 = vsyncadd %s742, 0
          %s751 = smul.addr %s21, 8
          %s752 = scalar_lea.hbm %s3, %s751
          %s754 = sshll.u32 %s745, 4
          %s755 = int_to_ptr.vmem [resolvable:$true] %s754
          %s756 = sshll.u32 %s752, 4
          %s757 = int_to_ptr.hbm [resolvable:$true] %s756
          %759 = dma.vmem_to_hbm [thread:$0]  %s755, 128, %s757, %s742
        $region44: #{tpu_custom_call.1} parent=31 // pred_fallthru
          _
      $region32: #{tpu_custom_call.1} parent=5 // pred_fallthru
        _
      %p760 = scmp.le.s32.totalorder 2, %s16
      // Predicated region
      $region45: #{tpu_custom_call.1} parent=5 // pred_check
        %p761 = pneg %p760
      $region46: #{tpu_custom_call.1} parent=5 // pred_check_branch
        %763 = sbr.rel (%p761) target = $region48
      $region47: #{tpu_custom_call.1} parent=5 // pred_region
        %s764 = ssub.s32 %s16, 2
        // Predicated region
        $region49: #{tpu_custom_call.1} parent=47 // pred_check
          %p765 = pneg %p113
        $region50: #{tpu_custom_call.1} parent=47 // pred_check_branch
          %767 = sbr.rel (%p765) target = $region52
        $region51: #{tpu_custom_call.1} parent=47 // pred_region
          %s768 = sand.u32 %s98, 1
          %s769 = scalar_lea.sflag [#allocation4], %s768
          %s770 = sand.u32 %s98, 1
          %s771 = smul.addr %s770, 8
          %s772 = scalar_lea.vmem [#allocation7], %s771
          %774 = dma.done %s769, 128
        $region52: #{tpu_custom_call.1} parent=47 // pred_fallthru
          _
      $region48: #{tpu_custom_call.1} parent=5 // pred_fallthru
        _
    $region6: #{tpu_custom_call.1} parent=1 // loop_footer
      %s20 = sadd.s32 1, %s16
    $region7: #{tpu_custom_call.1} parent=1 // loop_footer_branch
      %15 = sbr.rel target = $region3
    $region8: #{tpu_custom_call.1} parent=1 // loop_exit
      _
    %775 = vsyncpa [#allocation3], 1
    %s776 = scalar_lea.sflag [#allocation3], 1
    %777 = vsyncpa %s776, 1
    %778 = vsyncpa [#allocation6], 1
    %779 = vsyncpa [#allocation4], 1
    %s780 = scalar_lea.sflag [#allocation4], 1
    %781 = vsyncpa %s780, 1

</llo_original>
